<compile_context>
chip_gen: v6e
topology: v6e:2x2x1
jax: 0.10.0
libtpu: 0.0.40
codegen_flags: <defaults>
</compile_context>

<pallas_src>
import jax
import jax.numpy as jnp
from jax.experimental import pallas as pl
from jax.experimental.pallas import tpu as pltpu


def mynet_kernel(pf_ref, bigw_ref, fw2_ref, o_ref):
    # Conv2d(3,10,2,stride=2) + bias + ReLU as one lane-major MXU matmul against
    # the block-diagonal im2col weight (conv bias folded via the ones column).
    s = jnp.dot(pf_ref[...], bigw_ref[...],
                preferred_element_type=jnp.float32)      # [1, 176]
    s = jnp.maximum(s, 0.0)                              # ReLU (ones lanes stay 1)

    # Linear(160, 5): second MXU matmul; fc bias folded into fw2.
    o_ref[...] = jnp.dot(s, fw2_ref[...],
                         preferred_element_type=jnp.float32)   # [1, 5] lane-major


def prepare_params(conv_w, conv_b, fc_w, fc_b):
    """One-time weight packing (hoisted out of the per-call path)."""
    # Conv weight [10,3,2,2] (OIHW) -> [12,10] so rows match patch feature order
    # f = ic*4 + kh*2 + kw.
    cw = conv_w.reshape(10, 12).T.astype(jnp.float32)            # [12, 10]

    # Augment with the bias row + a "ones" output column (survives ReLU as 1).
    cw_aug = jnp.zeros((13, 11), jnp.float32)
    cw_aug = cw_aug.at[:12, :10].set(cw)
    cw_aug = cw_aug.at[12, :10].set(conv_b.astype(jnp.float32))
    cw_aug = cw_aug.at[12, 10].set(1.0)

    # Block-diagonal expansion so the conv is a single [1,208] @ [208,176] matmul
    # whose output is already flattened in (p, oc') order.
    eye16 = jnp.eye(16, dtype=jnp.float32)
    bigw = jnp.einsum("pq,fo->pfqo", eye16, cw_aug).reshape(16 * 13, 16 * 11)  # [208,176]

    # FC weight [5,160] -> [176,5]: fw2[p*11+oc, j] = fc_w[j, oc*16+p] (torch
    # flatten order oc*16 + p), fc bias folded at the p=0 ones position.
    fw3 = fc_w.reshape(5, 10, 16).transpose(2, 1, 0).astype(jnp.float32)  # [16,10,5]
    fw3 = jnp.pad(fw3, ((0, 0), (0, 1), (0, 0)))                          # [16,11,5]
    fw3 = fw3.at[0, 10, :].set(fc_b.astype(jnp.float32))
    fw2 = fw3.reshape(176, 5)
    return bigw, fw2


@jax.jit
def mynet_forward(x, bigw, fw2):
    """x: [1, 3, 8, 8] NCHW.  Returns shape (5,), matching PyTorch MyNet.forward."""
    n, c, h, w = x.shape
    assert (n, c, h, w) == (1, 3, 8, 8)

    # im2col for a 2x2 / stride-2 conv (input-dependent, stays in the call path).
    xp = x.reshape(1, 3, 4, 2, 4, 2)            # n, ic, oh, kh, ow, kw
    xp = xp.transpose(0, 2, 4, 1, 3, 5)         # n, oh, ow, ic, kh, kw
    patches = xp.reshape(16, 12).astype(jnp.float32)
    patches = jnp.concatenate(
        [patches, jnp.ones((16, 1), jnp.float32)], axis=1)      # [16, 13] (bias col)
    pflat = patches.reshape(1, 16 * 13)                         # [1, 208] lane-major

    out = pl.pallas_call(
        mynet_kernel,
        out_shape=jax.ShapeDtypeStruct((1, 5), jnp.float32),
        in_specs=[
            pl.BlockSpec(memory_space=pltpu.MemorySpace.VMEM),  # pflat [1,208]
            pl.BlockSpec(memory_space=pltpu.MemorySpace.VMEM),  # bigw  [208,176]
            pl.BlockSpec(memory_space=pltpu.MemorySpace.VMEM),  # fw2   [176,5]
        ],
        out_specs=pl.BlockSpec(memory_space=pltpu.MemorySpace.VMEM),
    )(pflat, bigw, fw2)
    return out[0]                                               # shape (5,)


def reference_forward(x, conv_w, conv_b, fc_w, fc_b):
    """Plain-JAX reference mirroring the PyTorch forward (for verification)."""
    out = jax.lax.conv_general_dilated(
        x, conv_w, window_strides=(2, 2), padding="VALID",
        dimension_numbers=("NCHW", "OIHW", "NCHW"))
    out = out + conv_b[None, :, None, None]
    out = jnp.maximum(out, 0.0)
    flat = out.reshape(-1)                                      # 160 (torch .view(-1))
    return fc_w @ flat + fc_b


if __name__ == "__main__":
    key = jax.random.PRNGKey(0)
    k1, k2, k3, k4, k5 = jax.random.split(key, 5)

    # Deterministic synthetic parameters (shapes from MyNet.__init__).
    conv_w = jax.random.normal(k1, (10, 3, 2, 2), dtype=jnp.float32) * 0.1
    conv_b = jax.random.normal(k2, (10,), dtype=jnp.float32) * 0.1
    fc_w = jax.random.normal(k3, (5, 160), dtype=jnp.float32) * 0.05
    fc_b = jax.random.normal(k4, (5,), dtype=jnp.float32) * 0.05

    # Input: flatten to 160 features implies batch=1, spatial 8x8 (conv out 10x4x4).
    x = jax.random.normal(k5, (1, 3, 8, 8), dtype=jnp.float32)

    # One-time weight packing (hoisted out of the forward path).
    bigw, fw2 = prepare_params(conv_w, conv_b, fc_w, fc_b)
    bigw, fw2 = jax.block_until_ready((bigw, fw2))

    y = mynet_forward(x, bigw, fw2)
    y = jax.block_until_ready(y)

    y_ref = reference_forward(x, conv_w, conv_b, fc_w, fc_b)
    assert y.shape == (5,)
    assert jnp.allclose(y, y_ref, rtol=1e-4, atol=1e-4), (y, y_ref)

    print("KERNEL_OK")
</pallas_src>

<mosaic_0001>
module attributes {stable_mosaic.version = 11 : i64} {
  func.func @mynet_kernel(%arg0: memref<1x208xf32, #tpu.memory_space<vmem>>, %arg1: memref<208x176xf32, #tpu.memory_space<vmem>>, %arg2: memref<176x5xf32, #tpu.memory_space<vmem>>, %arg3: memref<1x5xf32, #tpu.memory_space<vmem>>) attributes {dimension_semantics = [], scalar_prefetch = 0 : i64, scratch_operands = 0 : i64, tpu.core_type = #tpu.core_type<tc>} {
    %c0 = arith.constant 0 : index
    %c0_0 = arith.constant 0 : index
    %0 = vector.load %arg0[%c0, %c0_0] : memref<1x208xf32, #tpu.memory_space<vmem>>, vector<1x208xf32>
    %c0_1 = arith.constant 0 : index
    %c0_2 = arith.constant 0 : index
    %1 = vector.load %arg1[%c0_1, %c0_2] : memref<208x176xf32, #tpu.memory_space<vmem>>, vector<208x176xf32>
    %cst = arith.constant dense<0.000000e+00> : vector<1x176xf32>
    %2 = tpu.matmul %0, %1, %cst {dimension_numbers = #tpu.dot_dimension_numbers<[1], [0], [0], [1], [0, 0, 1, 1], [], []>} : vector<1x208xf32>, vector<208x176xf32>, vector<1x176xf32> -> vector<1x176xf32>
    %cst_3 = arith.constant 0.000000e+00 : f32
    %3 = vector.broadcast %cst_3 : f32 to vector<1x176xf32>
    %4 = arith.maximumf %2, %3 : vector<1x176xf32>
    %c0_4 = arith.constant 0 : index
    %c0_5 = arith.constant 0 : index
    %5 = vector.load %arg2[%c0_4, %c0_5] : memref<176x5xf32, #tpu.memory_space<vmem>>, vector<176x5xf32>
    %cst_6 = arith.constant dense<0.000000e+00> : vector<1x5xf32>
    %6 = tpu.matmul %4, %5, %cst_6 {dimension_numbers = #tpu.dot_dimension_numbers<[1], [0], [0], [1], [0, 0, 1, 1], [], []>} : vector<1x176xf32>, vector<176x5xf32>, vector<1x5xf32> -> vector<1x5xf32>
    %c0_7 = arith.constant 0 : index
    %c0_8 = arith.constant 0 : index
    %7 = vector.load %arg3[%c0_7, %c0_8] : memref<1x5xf32, #tpu.memory_space<vmem>>, vector<1x5xf32>
    tpu.vector_store %arg3[%c0_7, %c0_8], %6 {strides = array<i32>} : memref<1x5xf32, #tpu.memory_space<vmem>>, vector<1x5xf32>,
    return
  }
}

</mosaic_0001>

<llo_original>
// kernel: mynet_forward.1
$region0: #{mynet_forward.1}
  #allocation0 [shape = 'u32[]', space=smem, size = 0x4, offset = 0x4, fixed_abs, tag = 'smem constant byte address 0x4 - core index']
  #allocation1 [shape = 'u32[144,128]{1,0:T(1,128)}', space=vmem, size = 0x12000, scoped, tag = 'internal scratch']
  %s0 = inlined_call_operand.vmem [shape: f32[1,208], index: 0, kind: input, shape index: {}]
  %s1 = inlined_call_operand.vmem [shape: f32[208,176], index: 1, kind: input, shape index: {}]
  %s2 = inlined_call_operand.vmem [shape: f32[176,5], index: 2, kind: input, shape index: {}]
  %s3 = inlined_call_operand.hbm [shape: f32[1,5], index: 3, kind: output, shape index: {}]
  %s4 = sld [smem:[#allocation0]]
  $region22: #{mynet_forward.1} parent=0
    _
  %s6 = ssub.s32 1, %s4
  %s7 = scalar_select 0, %s6, %s4
  $region1: #{mynet_forward.1} parent=0
    #allocation2 [shape = 'u8[512]{0}', space=vmem, size = 0x400, scoped, tag = 'output window, operand 0, single buffered']
    #allocation3 [shape = 's32[1]{0}', space=sflag, size = 0x4, scoped, tag = 'scoped memory for mynet_forward.1']
    %8 = vsyncpa [#allocation3], 0
    // Predicated region
    $region2: #{mynet_forward.1} parent=1 // pred_check
      _
    $region3: #{mynet_forward.1} parent=1 // pred_check_branch
      %10 = sbr.rel (0) target = $region5
    $region4: #{mynet_forward.1} parent=1 // pred_region
      _
    $region5: #{mynet_forward.1} parent=1 // pred_fallthru
      _
    // Predicated region
    $region6: #{mynet_forward.1} parent=1 // pred_check
      _
    $region7: #{mynet_forward.1} parent=1 // pred_check_branch
      %12 = sbr.rel (0) target = $region9
    $region8: #{mynet_forward.1} parent=1 // pred_region
      _
    $region9: #{mynet_forward.1} parent=1 // pred_fallthru
      _
    // Predicated region
    $region10: #{mynet_forward.1} parent=1 // pred_check
      _
    $region11: #{mynet_forward.1} parent=1 // pred_check_branch
      %14 = sbr.rel (0) target = $region13
    $region12: #{mynet_forward.1} parent=1 // pred_region
      _
    $region13: #{mynet_forward.1} parent=1 // pred_fallthru
      _
    %v15 = vld [vmem:[%s0] sm:$0x3]
    %v16 = vld [vmem:[%s1] sm:$0xff]
    %v17 = vld [vmem:[%s1 + $0x8] sm:$0xff]
    %v18 = vld [vmem:[%s1 + $0x10] sm:$0xff]
    %v19 = vld [vmem:[%s1 + $0x18] sm:$0xff]
    %v20 = vld [vmem:[%s1 + $0x20] sm:$0xff]
    %v21 = vld [vmem:[%s1 + $0x28] sm:$0xff]
    %v22 = vld [vmem:[%s1 + $0x30] sm:$0xff]
    %v23 = vld [vmem:[%s1 + $0x38] sm:$0xff]
    %v24 = vld [vmem:[%s1 + $0x40] sm:$0xff]
    %v25 = vld [vmem:[%s1 + $0x48] sm:$0xff]
    %v26 = vld [vmem:[%s1 + $0x50] sm:$0xff]
    %v27 = vld [vmem:[%s1 + $0x58] sm:$0xff]
    %v28 = vld [vmem:[%s1 + $0x60] sm:$0xff]
    %v29 = vld [vmem:[%s1 + $0x68] sm:$0xff]
    %v30 = vld [vmem:[%s1 + $0x70] sm:$0xff]
    %v31 = vld [vmem:[%s1 + $0x78] sm:$0xff]
    %v32 = vld [vmem:[%s1 + $0x80] sm:$0xff]
    %v33 = vld [vmem:[%s1 + $0x88] sm:$0xff]
    %v34 = vld [vmem:[%s1 + $0x90] sm:$0xff]
    %v35 = vld [vmem:[%s1 + $0x98] sm:$0xff]
    %v36 = vld [vmem:[%s1 + $0xa0] sm:$0xff]
    %v37 = vld [vmem:[%s1 + $0xa8] sm:$0xff]
    %v38 = vld [vmem:[%s1 + $0xb0] sm:$0xff]
    %v39 = vld [vmem:[%s1 + $0xb8] sm:$0xff]
    %v40 = vld [vmem:[%s1 + $0xc0] sm:$0xff]
    %v41 = vld [vmem:[%s1 + $0xc8] sm:$0xff]
    %v42 = vld [vmem:[%s1 + $0xd0] sm:$0xff]
    %v43 = vld [vmem:[%s1 + $0xd8] sm:$0xff]
    %v44 = vld [vmem:[%s1 + $0xe0] sm:$0xff]
    %v45 = vld [vmem:[%s1 + $0xe8] sm:$0xff]
    %v46 = vld [vmem:[%s1 + $0xf0] sm:$0xff]
    %v47 = vld [vmem:[%s1 + $0xf8] sm:$0xff]
    %v48 = vld [vmem:[%s1 + $0x100] sm:$0xff]
    %v49 = vld [vmem:[%s1 + $0x108] sm:$0xff]
    %v50 = vld [vmem:[%s1 + $0x110] sm:$0xff]
    %v51 = vld [vmem:[%s1 + $0x118] sm:$0xff]
    %v52 = vld [vmem:[%s1 + $0x120] sm:$0xff]
    %v53 = vld [vmem:[%s1 + $0x128] sm:$0xff]
    %v54 = vld [vmem:[%s1 + $0x130] sm:$0xff]
    %v55 = vld [vmem:[%s1 + $0x138] sm:$0xff]
    %v56 = vld [vmem:[%s1 + $0x140] sm:$0xff]
    %v57 = vld [vmem:[%s1 + $0x148] sm:$0xff]
    %v58 = vld [vmem:[%s1 + $0x150] sm:$0xff]
    %v59 = vld [vmem:[%s1 + $0x158] sm:$0xff]
    %v60 = vld [vmem:[%s1 + $0x160] sm:$0xff]
    %v61 = vld [vmem:[%s1 + $0x168] sm:$0xff]
    %v62 = vld [vmem:[%s1 + $0x170] sm:$0xff]
    %v63 = vld [vmem:[%s1 + $0x178] sm:$0xff]
    %v64 = vld [vmem:[%s1 + $0x180] sm:$0xff]
    %v65 = vld [vmem:[%s1 + $0x188] sm:$0xff]
    %v66 = vld [vmem:[%s1 + $0x190] sm:$0xff]
    %v67 = vld [vmem:[%s1 + $0x198] sm:$0xff]
    %v69 = vlaneseq
    %v70 = vshrl.u32 %v69, 7
    %v71 = vsub.s32 0, %v70
    %v72 = vrot.slane %v15, %v71
    %v73 = vlaneseq
    %v74 = vshrl.u32 %v73, 7
    %v75 = vsub.s32 1, %v74
    %v76 = vrot.slane %v15, %v75
    %vm78 = vcmask 654336
    %v79 = vsel %vm78, %v76, 0
    %81 = vmatprep.subr.mxu0 %v47
    %82 = vmatpush1.msra.mxu0 %v46
    %83 = vmatprep.subr.mxu0 %v45
    %84 = vmatpush1.msra.mxu0 %v44
    %85 = vmatprep.subr.mxu0 %v43
    %86 = vmatpush1.msra.mxu0 %v42
    %87 = vmatprep.subr.mxu0 %v41
    %88 = vmatpush1.msra.mxu0 %v40
    %89 = vmatprep.subr.mxu0 %v39
    %90 = vmatpush1.msra.mxu0 %v38
    %91 = vmatprep.subr.mxu0 %v37
    %92 = vmatpush1.msra.mxu0 %v36
    %93 = vmatprep.subr.mxu0 %v35
    %94 = vmatpush1.msra.mxu0 %v34
    %95 = vmatprep.subr.mxu0 %v33
    %96 = vmatpush1.msra.mxu0 %v32
    %97 = vmatprep.subr.mxu0 %v31
    %98 = vmatpush1.msra.mxu0 %v30
    %99 = vmatprep.subr.mxu0 %v29
    %100 = vmatpush1.msra.mxu0 %v28
    %101 = vmatprep.subr.mxu0 %v27
    %102 = vmatpush1.msra.mxu0 %v26
    %103 = vmatprep.subr.mxu0 %v25
    %104 = vmatpush1.msra.mxu0 %v24
    %105 = vmatprep.subr.mxu0 %v23
    %106 = vmatpush1.msra.mxu0 %v22
    %107 = vmatprep.subr.mxu0 %v21
    %108 = vmatpush1.msra.mxu0 %v20
    %109 = vmatprep.subr.mxu0 %v19
    %110 = vmatpush1.msra.mxu0 %v18
    %111 = vmatprep.subr.mxu0 %v17
    %112 = vmatpush1.msra.mxu0 %v16
    %113 = vmatprep.subr.mxu0 0.0
    %114 = vmatpush2.msra.mxu0 0.0
    %115 = vmatprep.subr.mxu0 0.0
    %116 = vmatpush2.msra.mxu0 0.0
    %117 = vmatprep.subr.mxu0 0.0
    %118 = vmatpush2.msra.mxu0 0.0
    %119 = vmatprep.subr.mxu0 0.0
    %120 = vmatpush2.msra.mxu0 0.0
    %121 = vmatprep.subr.mxu0 0.0
    %122 = vmatpush2.msra.mxu0 0.0
    %123 = vmatprep.subr.mxu0 0.0
    %124 = vmatpush2.msra.mxu0 0.0
    %125 = vmatprep.subr.mxu0 %v67
    %126 = vmatpush2.msra.mxu0 %v66
    %127 = vmatprep.subr.mxu0 %v65
    %128 = vmatpush2.msra.mxu0 %v64
    %129 = vmatprep.subr.mxu0 %v63
    %130 = vmatpush2.msra.mxu0 %v62
    %131 = vmatprep.subr.mxu0 %v61
    %132 = vmatpush2.msra.mxu0 %v60
    %133 = vmatprep.subr.mxu0 %v59
    %134 = vmatpush2.msra.mxu0 %v58
    %135 = vmatprep.subr.mxu0 %v57
    %136 = vmatpush2.msra.mxu0 %v56
    %137 = vmatprep.subr.mxu0 %v55
    %138 = vmatpush2.msra.mxu0 %v54
    %139 = vmatprep.subr.mxu0 %v53
    %140 = vmatpush2.msra.mxu0 %v52
    %141 = vmatprep.subr.mxu0 %v51
    %142 = vmatpush2.msra.mxu0 %v50
    %143 = vmatprep.subr.mxu0 %v49
    %144 = vmatpush2.msra.mxu0 %v48
    %145 = vmatprep.mubr.f32.mxu0 %v79
    %146 = vmatmul.mubr.f32.gmra.mxu0 %v72
    %v147 = vpop.f32.mrf.mxu0
    %v148 = vadd.f32 0.0, %v147
    %v149 = vpop.f32.mrf.mxu0
    %v150 = vadd.f32 0.0, %v149
    %151 = vdwg.mxu0
    %v152 = vmax.f32 %v148, 0.0
    %v153 = vmax.f32 %v150, 0.0
    %v154 = vld [vmem:[%s2] sm:$0xff]
    %v155 = vld [vmem:[%s2 + $0x8] sm:$0xff]
    %v156 = vld [vmem:[%s2 + $0x10] sm:$0xff]
    %v157 = vld [vmem:[%s2 + $0x18] sm:$0xff]
    %v158 = vld [vmem:[%s2 + $0x20] sm:$0xff]
    %v159 = vld [vmem:[%s2 + $0x28] sm:$0xff]
    %v160 = vld [vmem:[%s2 + $0x30] sm:$0xff]
    %v161 = vld [vmem:[%s2 + $0x38] sm:$0xff]
    %v162 = vld [vmem:[%s2 + $0x40] sm:$0xff]
    %v163 = vld [vmem:[%s2 + $0x48] sm:$0xff]
    %v164 = vld [vmem:[%s2 + $0x50] sm:$0xff]
    %v165 = vld [vmem:[%s2 + $0x58] sm:$0xff]
    %v166 = vld [vmem:[%s2 + $0x60] sm:$0xff]
    %v167 = vld [vmem:[%s2 + $0x68] sm:$0xff]
    %v168 = vld [vmem:[%s2 + $0x70] sm:$0xff]
    %v169 = vld [vmem:[%s2 + $0x78] sm:$0xff]
    %v170 = vld [vmem:[%s2 + $0x80] sm:$0xff]
    %v171 = vld [vmem:[%s2 + $0x88] sm:$0xff]
    %v172 = vld [vmem:[%s2 + $0x90] sm:$0xff]
    %v173 = vld [vmem:[%s2 + $0x98] sm:$0xff]
    %v174 = vld [vmem:[%s2 + $0xa0] sm:$0xff]
    %v175 = vld [vmem:[%s2 + $0xa8] sm:$0xff]
    %vm176 = vcmask 392192
    %v178 = vsel %vm176, %v153, 0
    %180 = vmatprep.subr.mxu0 0.0
    %181 = vmatpush1.msra.mxu0 %v169
    %182 = vmatprep.subr.mxu0 0.0
    %183 = vmatpush1.msra.mxu0 %v168
    %184 = vmatprep.subr.mxu0 0.0
    %185 = vmatpush1.msra.mxu0 %v167
    %186 = vmatprep.subr.mxu0 0.0
    %187 = vmatpush1.msra.mxu0 %v166
    %188 = vmatprep.subr.mxu0 0.0
    %189 = vmatpush1.msra.mxu0 %v165
    %190 = vmatprep.subr.mxu0 0.0
    %191 = vmatpush1.msra.mxu0 %v164
    %192 = vmatprep.subr.mxu0 0.0
    %193 = vmatpush1.msra.mxu0 %v163
    %194 = vmatprep.subr.mxu0 0.0
    %195 = vmatpush1.msra.mxu0 %v162
    %196 = vmatprep.subr.mxu0 0.0
    %197 = vmatpush1.msra.mxu0 %v161
    %198 = vmatprep.subr.mxu0 0.0
    %199 = vmatpush1.msra.mxu0 %v160
    %200 = vmatprep.subr.mxu0 0.0
    %201 = vmatpush1.msra.mxu0 %v159
    %202 = vmatprep.subr.mxu0 0.0
    %203 = vmatpush1.msra.mxu0 %v158
    %204 = vmatprep.subr.mxu0 0.0
    %205 = vmatpush1.msra.mxu0 %v157
    %206 = vmatprep.subr.mxu0 0.0
    %207 = vmatpush1.msra.mxu0 %v156
    %208 = vmatprep.subr.mxu0 0.0
    %209 = vmatpush1.msra.mxu0 %v155
    %210 = vmatprep.subr.mxu0 0.0
    %211 = vmatpush1.msra.mxu0 %v154
    %212 = vmatprep.subr.mxu0 0.0
    %213 = vmatpush2.msra.mxu0 0.0
    %214 = vmatprep.subr.mxu0 0.0
    %215 = vmatpush2.msra.mxu0 0.0
    %216 = vmatprep.subr.mxu0 0.0
    %217 = vmatpush2.msra.mxu0 0.0
    %218 = vmatprep.subr.mxu0 0.0
    %219 = vmatpush2.msra.mxu0 0.0
    %220 = vmatprep.subr.mxu0 0.0
    %221 = vmatpush2.msra.mxu0 0.0
    %222 = vmatprep.subr.mxu0 0.0
    %223 = vmatpush2.msra.mxu0 0.0
    %224 = vmatprep.subr.mxu0 0.0
    %225 = vmatpush2.msra.mxu0 0.0
    %226 = vmatprep.subr.mxu0 0.0
    %227 = vmatpush2.msra.mxu0 0.0
    %228 = vmatprep.subr.mxu0 0.0
    %229 = vmatpush2.msra.mxu0 0.0
    %230 = vmatprep.subr.mxu0 0.0
    %231 = vmatpush2.msra.mxu0 0.0
    %232 = vmatprep.subr.mxu0 0.0
    %233 = vmatpush2.msra.mxu0 %v175
    %234 = vmatprep.subr.mxu0 0.0
    %235 = vmatpush2.msra.mxu0 %v174
    %236 = vmatprep.subr.mxu0 0.0
    %237 = vmatpush2.msra.mxu0 %v173
    %238 = vmatprep.subr.mxu0 0.0
    %239 = vmatpush2.msra.mxu0 %v172
    %240 = vmatprep.subr.mxu0 0.0
    %241 = vmatpush2.msra.mxu0 %v171
    %242 = vmatprep.subr.mxu0 0.0
    %243 = vmatpush2.msra.mxu0 %v170
    %244 = vmatprep.mubr.f32.mxu0 %v178
    %245 = vmatmul.mubr.f32.gmra.mxu0 %v152
    %v246 = vpop.f32.mrf.mxu0
    %v247 = vadd.f32 0.0, %v246
    %v248 = vpop.f32.mrf.mxu0
    %249 = vdwg.mxu0
    %vm250 = vcmask 32768
    %251 = vst.msk [vmem:[#allocation2] sm:$0x1] %vm250, %v247
    // Predicated region
    $region14: #{mynet_forward.1} parent=1 // pred_check
      _
    $region15: #{mynet_forward.1} parent=1 // pred_check_branch
      %253 = sbr.rel (0) target = $region17
    $region16: #{mynet_forward.1} parent=1 // pred_region
      %s255 = ssub.s32 16, 16
      %256 = vsyncadd [#allocation3], %s255
      %s258 = sshll.u32 [#allocation2], 4
      %s259 = int_to_ptr.vmem [resolvable:$true] %s258
      %261 = dma.vmem_to_hbm [thread:$0]  %s259, 16, %s3, [#allocation3]
    $region17: #{mynet_forward.1} parent=1 // pred_fallthru
      _
    // Predicated region
    $region18: #{mynet_forward.1} parent=1 // pred_check
      _
    $region19: #{mynet_forward.1} parent=1 // pred_check_branch
      %263 = sbr.rel (0) target = $region21
    $region20: #{mynet_forward.1} parent=1 // pred_region
      %264 = dma.done [#allocation3], 16
    $region21: #{mynet_forward.1} parent=1 // pred_fallthru
      _
    %265 = vsyncpa [#allocation3], 1

</llo_original>
